<compile_context>
chip_gen: v5e
topology: v5e:2x2
jax: 0.10.0
libtpu: 0.0.40
codegen_flags: <defaults>
</compile_context>

<pallas_src>
import functools

import jax
import jax.numpy as jnp
from jax.experimental import pallas as pl
from jax.experimental.pallas import tpu as pltpu


def _round_up(x, m):
    return ((x + m - 1) // m) * m


def _cdiv(a, b):
    return (a + b - 1) // b


def _cw_loss_kernel(logits_ref, target_ref, out_ref, acc_ref, *,
                    confidence, batch, num_classes, block_cols, chunk_cols):
    """Processes one lane-dense (num_classes, block_cols) tile of logits^T.

    grid = (n_split, n_steps):
      axis 0 ("parallel")  -> batch split across TensorCores (v7x megacore)
      axis 1 ("arbitrary") -> streaming over column tiles, VMEM accumulator
    """
    split = pl.program_id(0)
    step = pl.program_id(1)
    n_steps = pl.num_programs(1)

    @pl.when(step == 0)
    def _():
        acc_ref[...] = jnp.zeros_like(acc_ref)

    col0 = (split * n_steps + step) * block_cols
    lane = jax.lax.broadcasted_iota(jnp.int32, (1, chunk_cols), 1)  # hoisted

    # Walk the tile in lane chunks so live values stay inside the vreg file.
    for j in range(block_cols // chunk_cols):
        sl = pl.ds(j * chunk_cols, chunk_cols)
        tgt = target_ref[:, sl]                                     # (1, TJ) i32

        real = jnp.zeros((1, chunk_cols), jnp.float32)
        other = jnp.full((1, chunk_cols), -jnp.inf, dtype=jnp.float32)
        # Unrolled, pure-VPU selects over the class rows; exactly reproduces
        # real = sum(onehot*x), other = max((1-onehot)*x - onehot*10000).
        for k in range(num_classes):
            row = logits_ref[pl.ds(k, 1), sl].astype(jnp.float32)   # (1, TJ)
            is_t = tgt == k
            real = jnp.where(is_t, row, real)
            other = jnp.maximum(other,
                                jnp.where(is_t, jnp.float32(-10000.0), row))

        loss = -jnp.maximum(real - other + confidence, 0.0)         # (1, TJ)
        valid = (lane + (col0 + j * chunk_cols)) < batch            # mask pad cols
        acc_ref[:, sl] = acc_ref[:, sl] + jnp.where(valid, loss, 0.0)

    @pl.when(step == n_steps - 1)
    def _():
        # Single deferred reduction; broadcast so the store is lane-dense.
        out_ref[...] = jnp.zeros_like(out_ref) + jnp.sum(acc_ref[...])


def cw_loss(logits_final, target, num_classes=10, confidence=50.0):
    """JAX/Pallas equivalent of CW_loss.forward (returns a scalar)."""
    B, C = logits_final.shape
    assert C == num_classes

    # Lane tile: multiple of 512 (so the 512-col in-kernel chunk divides it),
    # aiming for >= ~8 tiles on large batches, capped at 8192 columns.
    TB = int(min(8192, max(512, _round_up(_cdiv(B, 8), 512))))
    TJ = 512
    n_blocks = _cdiv(B, TB)
    n_split = 2 if n_blocks >= 2 else 1      # 2-TC split on v7x; cheap no-op elsewhere
    n_steps = _cdiv(n_blocks, n_split)
    B_pad = n_split * n_steps * TB

    # Lane-dense presentation: logits as (C, B_pad), target as (1, B_pad).
    # Padded columns are masked inside the kernel (contribute exactly 0).
    logits_t = jnp.pad(logits_final.T, ((0, 0), (0, B_pad - B)))
    target_row = jnp.pad(target.astype(jnp.int32).reshape(1, B),
                         ((0, 0), (0, B_pad - B)))

    # Padding-aware VMEM budget: lane dim pads to 128, class dim to 16
    # sublanes, target/acc rows to 8 sublanes, x2 pipeline buffers.
    itemsize = jnp.dtype(logits_final.dtype).itemsize
    c_pad = _round_up(C, 16)
    resident = (2 * c_pad * TB * itemsize     # logits tiles (double buffered)
                + 2 * 8 * TB * 4              # target row tiles
                + 8 * TB * 4                  # (1, TB) accumulator scratch
                + 2 * n_split * 8 * 128 * 4)  # output blocks
    vmem_limit = int(min(max(2 * resident, 8 << 20), 64 << 20))

    kernel = functools.partial(
        _cw_loss_kernel, confidence=float(confidence), batch=B,
        num_classes=C, block_cols=TB, chunk_cols=TJ)

    cost = pl.CostEstimate(
        flops=6 * B * C, transcendentals=0,
        bytes_accessed=C * B_pad * itemsize + B_pad * 4 + n_split * 8 * 128 * 4)

    out = pl.pallas_call(
        kernel,
        out_shape=jax.ShapeDtypeStruct((n_split * 8, 128), jnp.float32),
        grid_spec=pltpu.PrefetchScalarGridSpec(
            num_scalar_prefetch=0,
            grid=(n_split, n_steps),
            in_specs=[
                pl.BlockSpec((C, TB), lambda c, s: (0, c * n_steps + s)),
                pl.BlockSpec((1, TB), lambda c, s: (0, c * n_steps + s)),
            ],
            out_specs=pl.BlockSpec((8, 128), lambda c, s: (c, 0)),
            scratch_shapes=[pltpu.VMEM((1, TB), jnp.float32)],
        ),
        compiler_params=pltpu.CompilerParams(
            dimension_semantics=("parallel", "arbitrary"),
            vmem_limit_bytes=vmem_limit),
        cost_estimate=cost,
    )(logits_t, target_row)

    # Tiny wrapper-side add over the per-core partial sums.
    return jnp.sum(out[::8, 0])


def cw_loss_reference(logits, target, num_classes=10, confidence=50.0):
    """Pure-JAX reference matching the PyTorch module exactly."""
    logits = logits.astype(jnp.float32)
    onehot = jax.nn.one_hot(target, num_classes, dtype=jnp.float32)
    real = jnp.sum(onehot * logits, axis=1)
    other = jnp.max((1.0 - onehot) * logits - onehot * 10000.0, axis=1)
    loss = -jnp.maximum(real - other + confidence, 0.0)
    return jnp.sum(loss)


if __name__ == "__main__":
    NUM_CLASSES = 10
    key = jax.random.PRNGKey(0)
    k1, k2, k3 = jax.random.split(key, 3)

    # Small, spec-consistent shapes.
    B = 8
    logits = jax.random.normal(k1, (B, NUM_CLASSES), dtype=jnp.float32) * 5.0
    target = jax.random.randint(k2, (B,), 0, NUM_CLASSES, dtype=jnp.int32)
    loss = jax.block_until_ready(
        cw_loss(logits, target, num_classes=NUM_CLASSES, confidence=50.0))
    ref = cw_loss_reference(logits, target, num_classes=NUM_CLASSES, confidence=50.0)
    assert jnp.allclose(loss, ref, rtol=1e-5, atol=1e-2), (loss, ref)

    # An awkward batch size to exercise the padded / masked tiling path.
    B2 = 333
    logits2 = jax.random.normal(k3, (B2, NUM_CLASSES), dtype=jnp.float32) * 5.0
    target2 = jax.random.randint(k2, (B2,), 0, NUM_CLASSES, dtype=jnp.int32)
    loss2 = jax.block_until_ready(
        cw_loss(logits2, target2, num_classes=NUM_CLASSES, confidence=50.0))
    ref2 = cw_loss_reference(logits2, target2, num_classes=NUM_CLASSES, confidence=50.0)
    assert jnp.allclose(loss2, ref2, rtol=1e-5, atol=1e-2), (loss2, ref2)

    print("KERNEL_OK")
</pallas_src>

<mosaic_0001>
module attributes {stable_mosaic.version = 11 : i64} {
  func.func @_cw_loss_kernel(%arg0: i32, %arg1: i32, %arg2: memref<10x512xf32, #tpu.memory_space<vmem>>, %arg3: memref<1x512xi32, #tpu.memory_space<vmem>>, %arg4: memref<8x128xf32, #tpu.memory_space<vmem>>, %arg5: memref<1x512xf32, #tpu.memory_space<vmem>>) attributes {dimension_semantics = [#tpu.dimension_semantics<parallel>, #tpu.dimension_semantics<arbitrary>], iteration_bounds = array<i64: 1, 1>, scalar_prefetch = 0 : i64, scratch_operands = 1 : i64, tpu.core_type = #tpu.core_type<tc>, window_params = [{transform_indices = @transform_0, window_bounds = array<i64: 10, 512>}, {transform_indices = @transform_1, window_bounds = array<i64: 1, 512>}, {transform_indices = @transform_2, window_bounds = array<i64: 8, 128>}]} {
    %c0_i32 = arith.constant 0 : i32
    %0 = arith.cmpi eq, %arg1, %c0_i32 : i32
    %1 = arith.extui %0 : i1 to i32
    %c0_i32_0 = arith.constant 0 : i32
    %2 = arith.cmpi ne, %1, %c0_i32_0 : i32
    scf.if %2 {
      %cst_38 = arith.constant 0.000000e+00 : f32
      %100 = vector.broadcast %cst_38 : f32 to vector<1x512xf32>
      %c0_39 = arith.constant 0 : index
      %c0_40 = arith.constant 0 : index
      %101 = vector.load %arg5[%c0_39, %c0_40] : memref<1x512xf32, #tpu.memory_space<vmem>>, vector<1x512xf32>
      tpu.vector_store %arg5[%c0_39, %c0_40], %100 {strides = array<i32>} : memref<1x512xf32, #tpu.memory_space<vmem>>, vector<1x512xf32>,
    } else {
    }
    %c1_i32 = arith.constant 1 : i32
    %3 = arith.muli %arg0, %c1_i32 : i32
    %4 = arith.addi %3, %arg1 : i32
    %c512_i32 = arith.constant 512 : i32
    %5 = arith.muli %4, %c512_i32 : i32
    %6 = tpu.iota {dimensions = array<i32: 1>} : vector<1x512xi32>
    %c0 = arith.constant 0 : index
    %c0_1 = arith.constant 0 : index
    %7 = vector.load %arg3[%c0, %c0_1] : memref<1x512xi32, #tpu.memory_space<vmem>>, vector<1x512xi32>
    %cst = arith.constant 0.000000e+00 : f32
    %8 = vector.broadcast %cst : f32 to vector<1x512xf32>
    %cst_2 = arith.constant 0xFF800000 : f32
    %9 = vector.broadcast %cst_2 : f32 to vector<1x512xf32>
    %c0_3 = arith.constant 0 : index
    %c0_4 = arith.constant 0 : index
    %10 = vector.load %arg2[%c0_3, %c0_4] : memref<10x512xf32, #tpu.memory_space<vmem>>, vector<1x512xf32>
    %c0_i32_5 = arith.constant 0 : i32
    %11 = vector.broadcast %c0_i32_5 : i32 to vector<1x512xi32>
    %12 = arith.cmpi eq, %7, %11 : vector<1x512xi32>
    %13 = arith.select %12, %10, %8 : vector<1x512xi1>, vector<1x512xf32>
    %cst_6 = arith.constant -1.000000e+04 : f32
    %14 = vector.broadcast %cst_6 : f32 to vector<1x512xf32>
    %15 = arith.select %12, %14, %10 : vector<1x512xi1>, vector<1x512xf32>
    %16 = arith.maximumf %9, %15 : vector<1x512xf32>
    %c1 = arith.constant 1 : index
    %c0_7 = arith.constant 0 : index
    %17 = vector.load %arg2[%c1, %c0_7] : memref<10x512xf32, #tpu.memory_space<vmem>>, vector<1x512xf32>
    %c1_i32_8 = arith.constant 1 : i32
    %18 = vector.broadcast %c1_i32_8 : i32 to vector<1x512xi32>
    %19 = arith.cmpi eq, %7, %18 : vector<1x512xi32>
    %20 = arith.select %19, %17, %13 : vector<1x512xi1>, vector<1x512xf32>
    %cst_9 = arith.constant -1.000000e+04 : f32
    %21 = vector.broadcast %cst_9 : f32 to vector<1x512xf32>
    %22 = arith.select %19, %21, %17 : vector<1x512xi1>, vector<1x512xf32>
    %23 = arith.maximumf %16, %22 : vector<1x512xf32>
    %c2 = arith.constant 2 : index
    %c0_10 = arith.constant 0 : index
    %24 = vector.load %arg2[%c2, %c0_10] : memref<10x512xf32, #tpu.memory_space<vmem>>, vector<1x512xf32>
    %c2_i32 = arith.constant 2 : i32
    %25 = vector.broadcast %c2_i32 : i32 to vector<1x512xi32>
    %26 = arith.cmpi eq, %7, %25 : vector<1x512xi32>
    %27 = arith.select %26, %24, %20 : vector<1x512xi1>, vector<1x512xf32>
    %cst_11 = arith.constant -1.000000e+04 : f32
    %28 = vector.broadcast %cst_11 : f32 to vector<1x512xf32>
    %29 = arith.select %26, %28, %24 : vector<1x512xi1>, vector<1x512xf32>
    %30 = arith.maximumf %23, %29 : vector<1x512xf32>
    %c3 = arith.constant 3 : index
    %c0_12 = arith.constant 0 : index
    %31 = vector.load %arg2[%c3, %c0_12] : memref<10x512xf32, #tpu.memory_space<vmem>>, vector<1x512xf32>
    %c3_i32 = arith.constant 3 : i32
    %32 = vector.broadcast %c3_i32 : i32 to vector<1x512xi32>
    %33 = arith.cmpi eq, %7, %32 : vector<1x512xi32>
    %34 = arith.select %33, %31, %27 : vector<1x512xi1>, vector<1x512xf32>
    %cst_13 = arith.constant -1.000000e+04 : f32
    %35 = vector.broadcast %cst_13 : f32 to vector<1x512xf32>
    %36 = arith.select %33, %35, %31 : vector<1x512xi1>, vector<1x512xf32>
    %37 = arith.maximumf %30, %36 : vector<1x512xf32>
    %c4 = arith.constant 4 : index
    %c0_14 = arith.constant 0 : index
    %38 = vector.load %arg2[%c4, %c0_14] : memref<10x512xf32, #tpu.memory_space<vmem>>, vector<1x512xf32>
    %c4_i32 = arith.constant 4 : i32
    %39 = vector.broadcast %c4_i32 : i32 to vector<1x512xi32>
    %40 = arith.cmpi eq, %7, %39 : vector<1x512xi32>
    %41 = arith.select %40, %38, %34 : vector<1x512xi1>, vector<1x512xf32>
    %cst_15 = arith.constant -1.000000e+04 : f32
    %42 = vector.broadcast %cst_15 : f32 to vector<1x512xf32>
    %43 = arith.select %40, %42, %38 : vector<1x512xi1>, vector<1x512xf32>
    %44 = arith.maximumf %37, %43 : vector<1x512xf32>
    %c5 = arith.constant 5 : index
    %c0_16 = arith.constant 0 : index
    %45 = vector.load %arg2[%c5, %c0_16] : memref<10x512xf32, #tpu.memory_space<vmem>>, vector<1x512xf32>
    %c5_i32 = arith.constant 5 : i32
    %46 = vector.broadcast %c5_i32 : i32 to vector<1x512xi32>
    %47 = arith.cmpi eq, %7, %46 : vector<1x512xi32>
    %48 = arith.select %47, %45, %41 : vector<1x512xi1>, vector<1x512xf32>
    %cst_17 = arith.constant -1.000000e+04 : f32
    %49 = vector.broadcast %cst_17 : f32 to vector<1x512xf32>
    %50 = arith.select %47, %49, %45 : vector<1x512xi1>, vector<1x512xf32>
    %51 = arith.maximumf %44, %50 : vector<1x512xf32>
    %c6 = arith.constant 6 : index
    %c0_18 = arith.constant 0 : index
    %52 = vector.load %arg2[%c6, %c0_18] : memref<10x512xf32, #tpu.memory_space<vmem>>, vector<1x512xf32>
    %c6_i32 = arith.constant 6 : i32
    %53 = vector.broadcast %c6_i32 : i32 to vector<1x512xi32>
    %54 = arith.cmpi eq, %7, %53 : vector<1x512xi32>
    %55 = arith.select %54, %52, %48 : vector<1x512xi1>, vector<1x512xf32>
    %cst_19 = arith.constant -1.000000e+04 : f32
    %56 = vector.broadcast %cst_19 : f32 to vector<1x512xf32>
    %57 = arith.select %54, %56, %52 : vector<1x512xi1>, vector<1x512xf32>
    %58 = arith.maximumf %51, %57 : vector<1x512xf32>
    %c7 = arith.constant 7 : index
    %c0_20 = arith.constant 0 : index
    %59 = vector.load %arg2[%c7, %c0_20] : memref<10x512xf32, #tpu.memory_space<vmem>>, vector<1x512xf32>
    %c7_i32 = arith.constant 7 : i32
    %60 = vector.broadcast %c7_i32 : i32 to vector<1x512xi32>
    %61 = arith.cmpi eq, %7, %60 : vector<1x512xi32>
    %62 = arith.select %61, %59, %55 : vector<1x512xi1>, vector<1x512xf32>
    %cst_21 = arith.constant -1.000000e+04 : f32
    %63 = vector.broadcast %cst_21 : f32 to vector<1x512xf32>
    %64 = arith.select %61, %63, %59 : vector<1x512xi1>, vector<1x512xf32>
    %65 = arith.maximumf %58, %64 : vector<1x512xf32>
    %c8 = arith.constant 8 : index
    %c0_22 = arith.constant 0 : index
    %66 = vector.load %arg2[%c8, %c0_22] : memref<10x512xf32, #tpu.memory_space<vmem>>, vector<1x512xf32>
    %c8_i32 = arith.constant 8 : i32
    %67 = vector.broadcast %c8_i32 : i32 to vector<1x512xi32>
    %68 = arith.cmpi eq, %7, %67 : vector<1x512xi32>
    %69 = arith.select %68, %66, %62 : vector<1x512xi1>, vector<1x512xf32>
    %cst_23 = arith.constant -1.000000e+04 : f32
    %70 = vector.broadcast %cst_23 : f32 to vector<1x512xf32>
    %71 = arith.select %68, %70, %66 : vector<1x512xi1>, vector<1x512xf32>
    %72 = arith.maximumf %65, %71 : vector<1x512xf32>
    %c9 = arith.constant 9 : index
    %c0_24 = arith.constant 0 : index
    %73 = vector.load %arg2[%c9, %c0_24] : memref<10x512xf32, #tpu.memory_space<vmem>>, vector<1x512xf32>
    %c9_i32 = arith.constant 9 : i32
    %74 = vector.broadcast %c9_i32 : i32 to vector<1x512xi32>
    %75 = arith.cmpi eq, %7, %74 : vector<1x512xi32>
    %76 = arith.select %75, %73, %69 : vector<1x512xi1>, vector<1x512xf32>
    %cst_25 = arith.constant -1.000000e+04 : f32
    %77 = vector.broadcast %cst_25 : f32 to vector<1x512xf32>
    %78 = arith.select %75, %77, %73 : vector<1x512xi1>, vector<1x512xf32>
    %79 = arith.maximumf %72, %78 : vector<1x512xf32>
    %80 = arith.subf %76, %79 : vector<1x512xf32>
    %cst_26 = arith.constant 5.000000e+01 : f32
    %81 = vector.broadcast %cst_26 : f32 to vector<1x512xf32>
    %82 = arith.addf %80, %81 : vector<1x512xf32>
    %cst_27 = arith.constant 0.000000e+00 : f32
    %83 = vector.broadcast %cst_27 : f32 to vector<1x512xf32>
    %84 = arith.maximumf %82, %83 : vector<1x512xf32>
    %cst_28 = arith.constant 0.000000e+00 : f32
    %85 = vector.broadcast %cst_28 : f32 to vector<1x512xf32>
    %86 = arith.subf %85, %84 : vector<1x512xf32>
    %c0_i32_29 = arith.constant 0 : i32
    %87 = arith.addi %5, %c0_i32_29 : i32
    %88 = vector.broadcast %87 : i32 to vector<1x512xi32>
    %89 = arith.addi %6, %88 : vector<1x512xi32>
    %c8_i32_30 = arith.constant 8 : i32
    %90 = vector.broadcast %c8_i32_30 : i32 to vector<1x512xi32>
    %91 = arith.cmpi slt, %89, %90 : vector<1x512xi32>
    %c0_31 = arith.constant 0 : index
    %c0_32 = arith.constant 0 : index
    %92 = vector.load %arg5[%c0_31, %c0_32] : memref<1x512xf32, #tpu.memory_space<vmem>>, vector<1x512xf32>
    %cst_33 = arith.constant 0.000000e+00 : f32
    %93 = vector.broadcast %cst_33 : f32 to vector<1x512xf32>
    %94 = arith.select %91, %86, %93 : vector<1x512xi1>, vector<1x512xf32>
    %95 = arith.addf %92, %94 : vector<1x512xf32>
    %c0_34 = arith.constant 0 : index
    %c0_35 = arith.constant 0 : index
    %96 = vector.load %arg5[%c0_34, %c0_35] : memref<1x512xf32, #tpu.memory_space<vmem>>, vector<1x512xf32>
    tpu.vector_store %arg5[%c0_34, %c0_35], %95 {strides = array<i32>} : memref<1x512xf32, #tpu.memory_space<vmem>>, vector<1x512xf32>,
    %c0_i32_36 = arith.constant 0 : i32
    %97 = arith.cmpi eq, %arg1, %c0_i32_36 : i32
    %98 = arith.extui %97 : i1 to i32
    %c0_i32_37 = arith.constant 0 : i32
    %99 = arith.cmpi ne, %98, %c0_i32_37 : i32
    scf.if %99 {
      %cst_38 = arith.constant 0.000000e+00 : f32
      %100 = vector.broadcast %cst_38 : f32 to vector<8x128xf32>
      %c0_39 = arith.constant 0 : index
      %c0_40 = arith.constant 0 : index
      %101 = vector.load %arg5[%c0_39, %c0_40] : memref<1x512xf32, #tpu.memory_space<vmem>>, vector<1x512xf32>
      %102 = vector.shape_cast %101 : vector<1x512xf32> to vector<1x1x512xf32>
      %cst_41 = arith.constant dense<0.000000e+00> : vector<1xf32>
      %103 = vector.multi_reduction <add>, %102, %cst_41 [1, 2] : vector<1x1x512xf32> to vector<1xf32>
      %104 = vector.shape_cast %103 : vector<1xf32> to vector<1x1x1xf32>
      %105 = vector.extract %104[0, 0, 0] : f32 from vector<1x1x1xf32>
      %106 = vector.broadcast %105 : f32 to vector<8x128xf32>
      %107 = arith.addf %100, %106 : vector<8x128xf32>
      %c0_42 = arith.constant 0 : index
      %c0_43 = arith.constant 0 : index
      %108 = vector.load %arg4[%c0_42, %c0_43] : memref<8x128xf32, #tpu.memory_space<vmem>>, vector<8x128xf32>
      tpu.vector_store %arg4[%c0_42, %c0_43], %107 {strides = array<i32>} : memref<8x128xf32, #tpu.memory_space<vmem>>, vector<8x128xf32>,
    } else {
    }
    return
  }
  func.func @transform_0(%arg0: i32, %arg1: i32) -> (i32, i32) {
    %c1_i32 = arith.constant 1 : i32
    %0 = arith.muli %arg0, %c1_i32 : i32
    %1 = arith.addi %0, %arg1 : i32
    %c0_i32 = arith.constant 0 : i32
    %c0_i32_0 = arith.constant 0 : i32
    return %c0_i32, %1 : i32, i32
  }
  func.func @transform_1(%arg0: i32, %arg1: i32) -> (i32, i32) {
    %c1_i32 = arith.constant 1 : i32
    %0 = arith.muli %arg0, %c1_i32 : i32
    %1 = arith.addi %0, %arg1 : i32
    %c0_i32 = arith.constant 0 : i32
    %c0_i32_0 = arith.constant 0 : i32
    return %c0_i32, %1 : i32, i32
  }
  func.func @transform_2(%arg0: i32, %arg1: i32) -> (i32, i32) {
    %c0_i32 = arith.constant 0 : i32
    %c0_i32_0 = arith.constant 0 : i32
    return %arg0, %c0_i32 : i32, i32
  }
}

</mosaic_0001>

<llo_original>
// kernel: tpu_custom_call.1
$region0: #{tpu_custom_call.1}
  #allocation0 [shape = 'u32[]', space=smem, size = 0x4, offset = 0x4, fixed_abs, tag = 'smem constant byte address 0x4 - core index']
  #allocation1 [shape = 'u32[72,128]{1,0:T(1,128)}', space=vmem, size = 0x9000, scoped, tag = 'internal scratch']
  #allocation2 [shape = 'f32[1,512]{1,0:T(1,128)}', space=vmem, size = 0x800, scoped, tag = 'scratch operand']
  %s0 = inlined_call_operand.hbm [shape: f32[10,512], index: 0, kind: input, shape index: {}]
  %s1 = inlined_call_operand.hbm [shape: s32[1,512], index: 1, kind: input, shape index: {}]
  %s2 = inlined_call_operand.hbm [shape: f32[8,128], index: 2, kind: output, shape index: {}]
  %s3 = sld [smem:[#allocation0]]
  $region34: #{tpu_custom_call.1} parent=0
    _
  %s5 = ssub.s32 1, %s3
  %s6 = scalar_select 0, %s5, %s3
  $region1: #{tpu_custom_call.1} parent=0
    #allocation3 [shape = 'u8[32768]{0}', space=vmem, size = 0x8000, scoped, tag = 'input window, operand 0, single buffered']
    #allocation4 [shape = 's32[1]{0}', space=sflag, size = 0x4, scoped, tag = 'scoped memory for tpu_custom_call.1']
    #allocation5 [shape = 's32[1]{0}', space=sflag, size = 0x4, scoped, tag = 'scoped memory for tpu_custom_call.1']
    #allocation6 [shape = 'u8[2048]{0}', space=vmem, size = 0x800, scoped, tag = 'input window, operand 1, single buffered']
    #allocation7 [shape = 's32[1]{0}', space=sflag, size = 0x4, scoped, tag = 'scoped memory for tpu_custom_call.1']
    #allocation8 [shape = 'u8[4096]{0}', space=vmem, size = 0x1000, scoped, tag = 'output window, operand 0, single buffered']
    %7 = vsyncpa [#allocation4], 0
    %8 = vsyncpa [#allocation7], 0
    %9 = vsyncpa [#allocation5], 0
    // Predicated region
    $region2: #{tpu_custom_call.1} parent=1 // pred_check
      _
    $region3: #{tpu_custom_call.1} parent=1 // pred_check_branch
      %11 = sbr.rel (0) target = $region5
    $region4: #{tpu_custom_call.1} parent=1 // pred_region
      %s12 = sadd.s32 0, 0
      %s13 = smul.u32 4, %s12
      %15 = vsyncadd [#allocation4], 0
      %s16 = smul.addr %s13, 8
      %s17 = scalar_lea.hbm %s0, %s16
      %s18 = sshll.u32 %s17, 4
      %s19 = int_to_ptr.hbm [resolvable:$true] %s18
      %s20 = sshll.u32 [#allocation3], 4
      %s21 = int_to_ptr.vmem [resolvable:$true] %s20
      %26 = dma.hbm_to_vmem [thread:$0]  %s19, 1024, %s21, [#allocation4], 512, 512, 32
    $region5: #{tpu_custom_call.1} parent=1 // pred_fallthru
      _
    // Predicated region
    $region6: #{tpu_custom_call.1} parent=1 // pred_check
      _
    $region7: #{tpu_custom_call.1} parent=1 // pred_check_branch
      %28 = sbr.rel (0) target = $region9
    $region8: #{tpu_custom_call.1} parent=1 // pred_region
      %s29 = sadd.s32 0, 0
      %s30 = smul.u32 4, %s29
      %32 = vsyncadd [#allocation7], 0
      %s33 = scalar_lea.hbm %s1, %s30
      %s35 = sshll.u32 %s33, 4
      %s36 = int_to_ptr.hbm [resolvable:$true] %s35
      %s37 = sshll.u32 [#allocation6], 4
      %s38 = int_to_ptr.vmem [resolvable:$true] %s37
      %40 = dma.hbm_to_vmem [thread:$0]  %s36, 64, %s38, [#allocation7]
    $region9: #{tpu_custom_call.1} parent=1 // pred_fallthru
      _
    // Predicated region
    $region10: #{tpu_custom_call.1} parent=1 // pred_check
      _
    $region11: #{tpu_custom_call.1} parent=1 // pred_check_branch
      %42 = sbr.rel (0) target = $region13
    $region12: #{tpu_custom_call.1} parent=1 // pred_region
      %44 = dma.done [#allocation4], 1024
    $region13: #{tpu_custom_call.1} parent=1 // pred_fallthru
      _
    // Predicated region
    $region14: #{tpu_custom_call.1} parent=1 // pred_check
      _
    $region15: #{tpu_custom_call.1} parent=1 // pred_check_branch
      %46 = sbr.rel (0) target = $region17
    $region16: #{tpu_custom_call.1} parent=1 // pred_region
      %48 = dma.done [#allocation7], 64
    $region17: #{tpu_custom_call.1} parent=1 // pred_fallthru
      _
    %s49 = sadd.s32 0, 0
    %s50 = smul.u32 4, %s49
    %s51 = sadd.s32 0, 0
    %s52 = smul.u32 4, %s51
    %p53 = scmp.eq.s32.totalorder 0, 0
    // Predicated region
    $region18: #{tpu_custom_call.1} parent=1 // pred_check
      %p54 = pneg %p53
    $region19: #{tpu_custom_call.1} parent=1 // pred_check_branch
      %56 = sbr.rel (%p54) target = $region21
    $region20: #{tpu_custom_call.1} parent=1 // pred_region
      %v57 = vlaneseq
      %vm58 = vcmp.ge.s32.totalorder %v57, 0
      %vm59 = vcmp.lt.s32.totalorder %v57, 512
      %vm60 = vmand %vm58, %vm59
      %61 = vst.msk [vmem:[#allocation2] sm:$0xf] %vm60, 0.0
    $region21: #{tpu_custom_call.1} parent=1 // pred_fallthru
      _
    %s62 = sadd.s32 0, 0
    %s63 = smul.u32 %s62, 512
    %v64 = vlaneseq
    %v65 = vand.u32 %v64, 127
    %v66 = vadd.s32 %v65, 128
    %v67 = vadd.s32 %v65, 256
    %v68 = vadd.s32 %v65, 384
    %v69 = vld [vmem:[#allocation6] sm:$0xf]
    %v70 = vld [vmem:[#allocation3] ss:$8 sm:$0xf]
    %vm71 = vcmp.eq.s32.totalorder %v69, 0
    %v72 = vsel %vm71, %v70, 0.0
    %v73 = vsel %vm71, -10000.0, %v70
    %s74 = scalar_lea.vmem [#allocation3], 1
    %v75 = vld [vmem:[%s74] ss:$8 sm:$0xf]
    %vm76 = vcmp.eq.s32.totalorder %v69, 1
    %v77 = vsel %vm76, %v75, %v72
    %v78 = vsel %vm76, -10000.0, %v75
    %v79 = vmax.f32 %v73, %v78
    %s80 = scalar_lea.vmem [#allocation3], 2
    %v81 = vld [vmem:[%s80] ss:$8 sm:$0xf]
    %vm82 = vcmp.eq.s32.totalorder %v69, 2
    %v83 = vsel %vm82, %v81, %v77
    %v84 = vsel %vm82, -10000.0, %v81
    %v85 = vmax.f32 %v79, %v84
    %s86 = scalar_lea.vmem [#allocation3], 3
    %v87 = vld [vmem:[%s86] ss:$8 sm:$0xf]
    %vm88 = vcmp.eq.s32.totalorder %v69, 3
    %v89 = vsel %vm88, %v87, %v83
    %v90 = vsel %vm88, -10000.0, %v87
    %v91 = vmax.f32 %v85, %v90
    %s92 = scalar_lea.vmem [#allocation3], 4
    %v93 = vld [vmem:[%s92] ss:$8 sm:$0xf]
    %vm94 = vcmp.eq.s32.totalorder %v69, 4
    %v95 = vsel %vm94, %v93, %v89
    %v96 = vsel %vm94, -10000.0, %v93
    %v97 = vmax.f32 %v91, %v96
    %s98 = scalar_lea.vmem [#allocation3], 5
    %v99 = vld [vmem:[%s98] ss:$8 sm:$0xf]
    %vm100 = vcmp.eq.s32.totalorder %v69, 5
    %v101 = vsel %vm100, %v99, %v95
    %v102 = vsel %vm100, -10000.0, %v99
    %v103 = vmax.f32 %v97, %v102
    %s104 = scalar_lea.vmem [#allocation3], 6
    %v105 = vld [vmem:[%s104] ss:$8 sm:$0xf]
    %vm106 = vcmp.eq.s32.totalorder %v69, 6
    %v107 = vsel %vm106, %v105, %v101
    %v108 = vsel %vm106, -10000.0, %v105
    %v109 = vmax.f32 %v103, %v108
    %s110 = scalar_lea.vmem [#allocation3], 7
    %v111 = vld [vmem:[%s110] ss:$8 sm:$0xf]
    %vm112 = vcmp.eq.s32.totalorder %v69, 7
    %v113 = vsel %vm112, %v111, %v107
    %v114 = vsel %vm112, -10000.0, %v111
    %v115 = vmax.f32 %v109, %v114
    %s116 = scalar_lea.vmem [#allocation3], 32
    %v117 = vld [vmem:[%s116] ss:$8 sm:$0xf]
    %vm118 = vcmp.eq.s32.totalorder %v69, 8
    %v119 = vsel %vm118, %v117, %v113
    %v120 = vsel %vm118, -10000.0, %v117
    %v121 = vmax.f32 %v115, %v120
    %s122 = scalar_lea.vmem [#allocation3], 33
    %v123 = vld [vmem:[%s122] ss:$8 sm:$0xf]
    %vm124 = vcmp.eq.s32.totalorder %v69, 9
    %v125 = vsel %vm124, %v123, %v119
    %v126 = vsel %vm124, -10000.0, %v123
    %v127 = vmax.f32 %v121, %v126
    %v128 = vsub.f32 %v125, %v127
    %v129 = vadd.f32 %v128, 50.0
    %v130 = vmax.f32 %v129, 0.0
    %v131 = vsub.f32 0.0, %v130
    %v132 = vstv %s63
    %v133 = vadd.s32 %v65, %v132
    %v134 = vadd.s32 %v66, %v132
    %v135 = vadd.s32 %v67, %v132
    %v136 = vadd.s32 %v68, %v132
    %vm137 = vcmp.lt.s32.totalorder %v133, 8
    %vm138 = vcmp.lt.s32.totalorder %v134, 8
    %vm139 = vcmp.lt.s32.totalorder %v135, 8
    %vm140 = vcmp.lt.s32.totalorder %v136, 8
    %v141 = vld [vmem:[#allocation2] sm:$0xf]
    %v143 = vperm.slane %v131, 0
    %v144 = vperm.slane %v131, 1
    %v145 = vperm.slane %v131, 2
    %v146 = vperm.slane %v131, 3
    %v151 = vsel %vm137, %v143, 0.0
    %v152 = vsel %vm138, %v144, 0.0
    %v153 = vsel %vm139, %v145, 0.0
    %v154 = vsel %vm140, %v146, 0.0
    %v159 = vrot.slane %v152, 7
    %v160 = vrot.slane %v153, 6
    %v161 = vrot.slane %v154, 5
    %vm162 = vcmask 1040384
    %v163 = vsel %vm162, %v151, %v159
    %vm164 = vcmask 1042434
    %v165 = vsel %vm164, %v160, %v161
    %vm166 = vcmask 1041408
    %v167 = vsel %vm166, %v163, %v165
    %v169 = vadd.f32 %v141, %v167
    %v170 = vlaneseq
    %vm171 = vcmp.ge.s32.totalorder %v170, 0
    %vm172 = vcmp.lt.s32.totalorder %v170, 512
    %vm173 = vmand %vm171, %vm172
    %174 = vst.msk [vmem:[#allocation2] sm:$0xf] %vm173, %v169
    // Predicated region
    $region22: #{tpu_custom_call.1} parent=1 // pred_check
      %p175 = pneg %p53
    $region23: #{tpu_custom_call.1} parent=1 // pred_check_branch
      %177 = sbr.rel (%p175) target = $region25
    $region24: #{tpu_custom_call.1} parent=1 // pred_region
      %v178 = vld [vmem:[#allocation2] sm:$0xf]
      %v180 = vperm.slane %v178, 0
      %v181 = vperm.slane %v178, 1
      %v182 = vperm.slane %v178, 2
      %v183 = vperm.slane %v178, 3
      %v188 = vsel %vm162, %v180, 0.0
      %v189 = vsel %vm162, %v181, 0.0
      %v190 = vadd.f32 %v188, %v189
      %v191 = vsel %vm162, %v182, 0.0
      %v192 = vadd.f32 %v190, %v191
      %v193 = vsel %vm162, %v183, 0.0
      %v194 = vadd.f32 %v192, %v193
      %195 = vadd.xlane.f32.xlu0 %v194
      %v196 = vpop.xlane.xlu0 %195
      %v197 = vrot.slane %v196, 4
      %v198 = vadd.f32 %v196, %v197
      %v199 = vrot.slane %v198, 2
      %v200 = vadd.f32 %v198, %v199
      %v201 = vrot.slane %v200, 1
      %v202 = vadd.f32 %v200, %v201
      %s203 = vtos %v202
      %v204 = vstv %s203
      %v205 = vadd.f32 %v204, 0.0
      %206 = vst [vmem:[#allocation8] sm:$0xff] %v205
    $region25: #{tpu_custom_call.1} parent=1 // pred_fallthru
      _
    // Predicated region
    $region26: #{tpu_custom_call.1} parent=1 // pred_check
      _
    $region27: #{tpu_custom_call.1} parent=1 // pred_check_branch
      %208 = sbr.rel (0) target = $region29
    $region28: #{tpu_custom_call.1} parent=1 // pred_region
      %210 = vsyncadd [#allocation5], 0
      %s212 = sshll.u32 [#allocation8], 4
      %s213 = int_to_ptr.vmem [resolvable:$true] %s212
      %s214 = sshll.u32 %s2, 4
      %s215 = int_to_ptr.hbm [resolvable:$true] %s214
      %217 = dma.vmem_to_hbm [thread:$0]  %s213, 128, %s215, [#allocation5]
    $region29: #{tpu_custom_call.1} parent=1 // pred_fallthru
      _
    // Predicated region
    $region30: #{tpu_custom_call.1} parent=1 // pred_check
      _
    $region31: #{tpu_custom_call.1} parent=1 // pred_check_branch
      %219 = sbr.rel (0) target = $region33
    $region32: #{tpu_custom_call.1} parent=1 // pred_region
      %221 = dma.done [#allocation5], 128
    $region33: #{tpu_custom_call.1} parent=1 // pred_fallthru
      _
    %222 = vsyncpa [#allocation4], 1
    %223 = vsyncpa [#allocation7], 1
    %224 = vsyncpa [#allocation5], 1

</llo_original>
